<compile_context>
chip_gen: v7x
topology: tpu7x:2x2x1
jax: 0.10.0
libtpu: 0.0.40
codegen_flags: <defaults>
</compile_context>

<pallas_src>
import functools
import math

import jax
import jax.numpy as jnp
from jax.experimental import pallas as pl
from jax.experimental.pallas import tpu as pltpu


# Per-grid-step block budget in bytes (input tile + output tile).
_STEP_BYTES_BUDGET = 4 << 20
# Max C*Cout handled by the unrolled VPU-FMA fused kernel (channel-MLP sizes).
_UNROLL_MAX = 256


def _channel_mlp_fused_kernel(x_ref, w_ref, b_ref, o_ref, *, C, Cout):
    """Fused-layout Channel_mlp block.

    x_ref: (1, C, N, tile_d)   VMEM  input tile (original NCHW layout, d on lanes)
    w_ref: (Cout, C)           SMEM  PyTorch-layout weight (read as scalars)
    b_ref: (Cout,)             SMEM  bias (read as scalars)
    o_ref: (1, tile_d, Cout*N) VMEM  output tile already in [B, D, Cout, N] order
    """
    # Load the C channel slabs once and reuse them for every output channel.
    xs = [x_ref[0, c].astype(jnp.float32) for c in range(C)]       # each (N, tile_d)
    pieces = []
    for co in range(Cout):
        acc = xs[0] * w_ref[co, 0]
        for c in range(1, C):
            acc = acc + xs[c] * w_ref[co, c]
        pieces.append(jnp.maximum(acc + b_ref[co], 0.0))           # (N, tile_d)
    # Cheap sublane-axis concat -> (Cout*N, tile_d); one 2-D transpose (XLU) so
    # the store is a single lane-dense slab in the module's output layout.
    y = jnp.concatenate(pieces, axis=0)                            # (Cout*N, tile_d)
    o_ref[0] = y.T.astype(o_ref.dtype)                             # (tile_d, Cout*N)


def _channel_mlp_gemm_kernel(x_ref, wt_ref, b_ref, o_ref):
    """Fallback transposed-GEMM block (large channel counts).

    x_ref: (1, C, T); wt_ref: (Cout, C); b_ref: (Cout, 1); o_ref: (1, Cout, T).
    """
    y = jnp.dot(wt_ref[...], x_ref[0], preferred_element_type=jnp.float32)
    o_ref[0] = jnp.maximum(y + b_ref[...], 0.0).astype(o_ref.dtype)


def _pick_tile_d(B, C, Cout, N, D, itemsize):
    """Choose the d-axis tile for the fused kernel (or None if not viable)."""
    col_bytes = (C + Cout) * N * itemsize          # HBM bytes moved per unit of d
    max_td = max(1, _STEP_BYTES_BUDGET // col_bytes)
    if D <= max_td:
        tile_d = D
        # v7x shards "parallel" grid axes across 2 TensorCores: keep >= ~8 grid
        # steps when that does not shrink per-step traffic below ~1 MiB.
        if B < 8 and D >= 256:
            want = max(1, math.ceil(8 / B))
            cand = math.ceil(D / want)
            cand = ((cand + 127) // 128) * 128     # keep blocks 128-multiples
            if 128 <= cand < D and cand * col_bytes >= (1 << 20):
                tile_d = cand
        return tile_d
    if max_td >= 128:
        return (max_td // 128) * 128               # tail d-block masked by Pallas
    return None                                    # fused path not viable


@jax.jit
def channel_mlp(x, w, b):
    """Channel_mlp forward.

    x: [B, C, N, D]; w: [C, Cout] (transpose of the PyTorch nn.Linear weight);
    b: [Cout].  Returns [B, D, Cout, N] (same as the PyTorch module).
    """
    B, C, N, D = x.shape
    Cout = w.shape[1]
    out_dtype = x.dtype
    itemsize = jnp.dtype(x.dtype).itemsize

    flops = 2 * B * C * Cout * N * D
    bytes_accessed = itemsize * B * (C + Cout) * N * D
    cost = pl.CostEstimate(flops=flops, transcendentals=0,
                           bytes_accessed=bytes_accessed)

    tile_d = _pick_tile_d(B, C, Cout, N, D, itemsize) if C * Cout <= _UNROLL_MAX else None

    if tile_d is not None:
        n_d = pl.cdiv(D, tile_d)
        out_flat = pl.pallas_call(
            functools.partial(_channel_mlp_fused_kernel, C=C, Cout=Cout),
            out_shape=jax.ShapeDtypeStruct((B, D, Cout * N), out_dtype),
            grid_spec=pltpu.PrefetchScalarGridSpec(
                num_scalar_prefetch=0,
                grid=(B, n_d),
                in_specs=[
                    pl.BlockSpec((1, C, N, tile_d), lambda bb, dj: (bb, 0, 0, dj)),
                    pl.BlockSpec(memory_space=pltpu.MemorySpace.SMEM),  # weight
                    pl.BlockSpec(memory_space=pltpu.MemorySpace.SMEM),  # bias
                ],
                out_specs=pl.BlockSpec((1, tile_d, Cout * N),
                                       lambda bb, dj: (bb, dj, 0)),
            ),
            compiler_params=pltpu.CompilerParams(
                dimension_semantics=("parallel", "parallel"),
            ),
            cost_estimate=cost,
        )(x, jnp.transpose(w), b)
        # Free reshape of the contiguous slab -- no HBM round-trip, no permute.
        return out_flat.reshape(B, D, Cout, N)

    # ---- Fallback: transposed-GEMM path for large channel counts. ----------
    Mp = N * D
    col_bytes = (C + Cout) * itemsize
    max_tc = max(128, ((_STEP_BYTES_BUDGET // col_bytes) // 128) * 128)
    tile_cols = Mp if Mp <= max_tc else max_tc
    n_col = pl.cdiv(Mp, tile_cols)
    out_flat = pl.pallas_call(
        _channel_mlp_gemm_kernel,
        out_shape=jax.ShapeDtypeStruct((B, Cout, Mp), out_dtype),
        grid_spec=pltpu.PrefetchScalarGridSpec(
            num_scalar_prefetch=0,
            grid=(B, n_col),
            in_specs=[
                pl.BlockSpec((1, C, tile_cols), lambda bb, j: (bb, 0, j)),
                pl.BlockSpec((Cout, C), lambda bb, j: (0, 0)),
                pl.BlockSpec((Cout, 1), lambda bb, j: (0, 0)),
            ],
            out_specs=pl.BlockSpec((1, Cout, tile_cols), lambda bb, j: (bb, 0, j)),
        ),
        compiler_params=pltpu.CompilerParams(
            dimension_semantics=("parallel", "parallel"),
        ),
        cost_estimate=cost,
    )(x.reshape(B, C, Mp), jnp.transpose(w), b.reshape(Cout, 1))
    # TODO(synk): fallback path still pays a materialized output permute; fuse
    # it into the downstream consumer when this branch is actually exercised.
    return jnp.transpose(out_flat.reshape(B, Cout, N, D), (0, 3, 1, 2))


if __name__ == "__main__":
    B, C, N, D = 2, 4, 16, 16      # input [Batch, n_channels, N, out_dim]
    Cout = 8

    key = jax.random.PRNGKey(0)
    kx, kw, kb = jax.random.split(key, 3)

    x = jax.random.normal(kx, (B, C, N, D), dtype=jnp.float32)
    # deterministic Linear params (PyTorch weight is [Cout, C]; w here is its transpose)
    bound = 1.0 / jnp.sqrt(C)
    w = jax.random.uniform(kw, (C, Cout), minval=-bound, maxval=bound, dtype=jnp.float32)
    b = jax.random.uniform(kb, (Cout,), minval=-bound, maxval=bound, dtype=jnp.float32)

    out = channel_mlp(x, w, b)
    jax.block_until_ready(out)

    # reference check in plain JAX
    ref = jnp.transpose(
        jnp.maximum(jnp.einsum("bcnd,co->bndo", x, w) + b, 0.0),
        (0, 2, 3, 1),
    )
    assert out.shape == (B, D, Cout, N)
    assert jnp.allclose(out, ref, atol=1e-5, rtol=1e-5)

    print("KERNEL_OK")
</pallas_src>

<mosaic_0001>
module attributes {stable_mosaic.version = 11 : i64} {
  func.func @_channel_mlp_fused_kernel(%arg0: i32, %arg1: i32, %arg2: memref<1x4x16x16xf32, #tpu.memory_space<vmem>>, %arg3: memref<8x4xf32, #tpu.memory_space<smem>>, %arg4: memref<8xf32, #tpu.memory_space<smem>>, %arg5: memref<1x16x128xf32, #tpu.memory_space<vmem>>) attributes {dimension_semantics = [#tpu.dimension_semantics<parallel>, #tpu.dimension_semantics<parallel>], iteration_bounds = array<i64: 2, 1>, scalar_prefetch = 0 : i64, scratch_operands = 0 : i64, tpu.core_type = #tpu.core_type<tc>, window_params = [{transform_indices = @transform_0, window_bounds = array<i64: 1, 4, 16, 16>}, {transform_indices = @transform_1, window_bounds = array<i64: 8, 4>}, {transform_indices = @transform_2, window_bounds = array<i64: 8>}, {transform_indices = @transform_3, window_bounds = array<i64: 1, 16, 128>}]} {
    %c0 = arith.constant 0 : index
    %c0_0 = arith.constant 0 : index
    %c0_1 = arith.constant 0 : index
    %c0_2 = arith.constant 0 : index
    %0 = vector.load %arg2[%c0, %c0_0, %c0_1, %c0_2] : memref<1x4x16x16xf32, #tpu.memory_space<vmem>>, vector<1x1x16x16xf32>
    %1 = vector.shape_cast %0 : vector<1x1x16x16xf32> to vector<16x16xf32>
    %c0_3 = arith.constant 0 : index
    %c1 = arith.constant 1 : index
    %c0_4 = arith.constant 0 : index
    %c0_5 = arith.constant 0 : index
    %2 = vector.load %arg2[%c0_3, %c1, %c0_4, %c0_5] : memref<1x4x16x16xf32, #tpu.memory_space<vmem>>, vector<1x1x16x16xf32>
    %3 = vector.shape_cast %2 : vector<1x1x16x16xf32> to vector<16x16xf32>
    %c0_6 = arith.constant 0 : index
    %c2 = arith.constant 2 : index
    %c0_7 = arith.constant 0 : index
    %c0_8 = arith.constant 0 : index
    %4 = vector.load %arg2[%c0_6, %c2, %c0_7, %c0_8] : memref<1x4x16x16xf32, #tpu.memory_space<vmem>>, vector<1x1x16x16xf32>
    %5 = vector.shape_cast %4 : vector<1x1x16x16xf32> to vector<16x16xf32>
    %c0_9 = arith.constant 0 : index
    %c3 = arith.constant 3 : index
    %c0_10 = arith.constant 0 : index
    %c0_11 = arith.constant 0 : index
    %6 = vector.load %arg2[%c0_9, %c3, %c0_10, %c0_11] : memref<1x4x16x16xf32, #tpu.memory_space<vmem>>, vector<1x1x16x16xf32>
    %7 = vector.shape_cast %6 : vector<1x1x16x16xf32> to vector<16x16xf32>
    %c0_12 = arith.constant 0 : index
    %c0_13 = arith.constant 0 : index
    %8 = memref.load %arg3[%c0_12, %c0_13] : memref<8x4xf32, #tpu.memory_space<smem>>
    %9 = vector.broadcast %8 : f32 to vector<16x16xf32>
    %10 = arith.mulf %1, %9 : vector<16x16xf32>
    %c0_14 = arith.constant 0 : index
    %c1_15 = arith.constant 1 : index
    %11 = memref.load %arg3[%c0_14, %c1_15] : memref<8x4xf32, #tpu.memory_space<smem>>
    %12 = vector.broadcast %11 : f32 to vector<16x16xf32>
    %13 = arith.mulf %3, %12 : vector<16x16xf32>
    %14 = arith.addf %10, %13 : vector<16x16xf32>
    %c0_16 = arith.constant 0 : index
    %c2_17 = arith.constant 2 : index
    %15 = memref.load %arg3[%c0_16, %c2_17] : memref<8x4xf32, #tpu.memory_space<smem>>
    %16 = vector.broadcast %15 : f32 to vector<16x16xf32>
    %17 = arith.mulf %5, %16 : vector<16x16xf32>
    %18 = arith.addf %14, %17 : vector<16x16xf32>
    %c0_18 = arith.constant 0 : index
    %c3_19 = arith.constant 3 : index
    %19 = memref.load %arg3[%c0_18, %c3_19] : memref<8x4xf32, #tpu.memory_space<smem>>
    %20 = vector.broadcast %19 : f32 to vector<16x16xf32>
    %21 = arith.mulf %7, %20 : vector<16x16xf32>
    %22 = arith.addf %18, %21 : vector<16x16xf32>
    %c0_20 = arith.constant 0 : index
    %23 = memref.load %arg4[%c0_20] : memref<8xf32, #tpu.memory_space<smem>>
    %24 = vector.broadcast %23 : f32 to vector<16x16xf32>
    %25 = arith.addf %22, %24 : vector<16x16xf32>
    %cst = arith.constant 0.000000e+00 : f32
    %26 = vector.broadcast %cst : f32 to vector<16x16xf32>
    %27 = arith.maximumf %25, %26 : vector<16x16xf32>
    %c1_21 = arith.constant 1 : index
    %c0_22 = arith.constant 0 : index
    %28 = memref.load %arg3[%c1_21, %c0_22] : memref<8x4xf32, #tpu.memory_space<smem>>
    %29 = vector.broadcast %28 : f32 to vector<16x16xf32>
    %30 = arith.mulf %1, %29 : vector<16x16xf32>
    %c1_23 = arith.constant 1 : index
    %c1_24 = arith.constant 1 : index
    %31 = memref.load %arg3[%c1_23, %c1_24] : memref<8x4xf32, #tpu.memory_space<smem>>
    %32 = vector.broadcast %31 : f32 to vector<16x16xf32>
    %33 = arith.mulf %3, %32 : vector<16x16xf32>
    %34 = arith.addf %30, %33 : vector<16x16xf32>
    %c1_25 = arith.constant 1 : index
    %c2_26 = arith.constant 2 : index
    %35 = memref.load %arg3[%c1_25, %c2_26] : memref<8x4xf32, #tpu.memory_space<smem>>
    %36 = vector.broadcast %35 : f32 to vector<16x16xf32>
    %37 = arith.mulf %5, %36 : vector<16x16xf32>
    %38 = arith.addf %34, %37 : vector<16x16xf32>
    %c1_27 = arith.constant 1 : index
    %c3_28 = arith.constant 3 : index
    %39 = memref.load %arg3[%c1_27, %c3_28] : memref<8x4xf32, #tpu.memory_space<smem>>
    %40 = vector.broadcast %39 : f32 to vector<16x16xf32>
    %41 = arith.mulf %7, %40 : vector<16x16xf32>
    %42 = arith.addf %38, %41 : vector<16x16xf32>
    %c1_29 = arith.constant 1 : index
    %43 = memref.load %arg4[%c1_29] : memref<8xf32, #tpu.memory_space<smem>>
    %44 = vector.broadcast %43 : f32 to vector<16x16xf32>
    %45 = arith.addf %42, %44 : vector<16x16xf32>
    %cst_30 = arith.constant 0.000000e+00 : f32
    %46 = vector.broadcast %cst_30 : f32 to vector<16x16xf32>
    %47 = arith.maximumf %45, %46 : vector<16x16xf32>
    %c2_31 = arith.constant 2 : index
    %c0_32 = arith.constant 0 : index
    %48 = memref.load %arg3[%c2_31, %c0_32] : memref<8x4xf32, #tpu.memory_space<smem>>
    %49 = vector.broadcast %48 : f32 to vector<16x16xf32>
    %50 = arith.mulf %1, %49 : vector<16x16xf32>
    %c2_33 = arith.constant 2 : index
    %c1_34 = arith.constant 1 : index
    %51 = memref.load %arg3[%c2_33, %c1_34] : memref<8x4xf32, #tpu.memory_space<smem>>
    %52 = vector.broadcast %51 : f32 to vector<16x16xf32>
    %53 = arith.mulf %3, %52 : vector<16x16xf32>
    %54 = arith.addf %50, %53 : vector<16x16xf32>
    %c2_35 = arith.constant 2 : index
    %c2_36 = arith.constant 2 : index
    %55 = memref.load %arg3[%c2_35, %c2_36] : memref<8x4xf32, #tpu.memory_space<smem>>
    %56 = vector.broadcast %55 : f32 to vector<16x16xf32>
    %57 = arith.mulf %5, %56 : vector<16x16xf32>
    %58 = arith.addf %54, %57 : vector<16x16xf32>
    %c2_37 = arith.constant 2 : index
    %c3_38 = arith.constant 3 : index
    %59 = memref.load %arg3[%c2_37, %c3_38] : memref<8x4xf32, #tpu.memory_space<smem>>
    %60 = vector.broadcast %59 : f32 to vector<16x16xf32>
    %61 = arith.mulf %7, %60 : vector<16x16xf32>
    %62 = arith.addf %58, %61 : vector<16x16xf32>
    %c2_39 = arith.constant 2 : index
    %63 = memref.load %arg4[%c2_39] : memref<8xf32, #tpu.memory_space<smem>>
    %64 = vector.broadcast %63 : f32 to vector<16x16xf32>
    %65 = arith.addf %62, %64 : vector<16x16xf32>
    %cst_40 = arith.constant 0.000000e+00 : f32
    %66 = vector.broadcast %cst_40 : f32 to vector<16x16xf32>
    %67 = arith.maximumf %65, %66 : vector<16x16xf32>
    %c3_41 = arith.constant 3 : index
    %c0_42 = arith.constant 0 : index
    %68 = memref.load %arg3[%c3_41, %c0_42] : memref<8x4xf32, #tpu.memory_space<smem>>
    %69 = vector.broadcast %68 : f32 to vector<16x16xf32>
    %70 = arith.mulf %1, %69 : vector<16x16xf32>
    %c3_43 = arith.constant 3 : index
    %c1_44 = arith.constant 1 : index
    %71 = memref.load %arg3[%c3_43, %c1_44] : memref<8x4xf32, #tpu.memory_space<smem>>
    %72 = vector.broadcast %71 : f32 to vector<16x16xf32>
    %73 = arith.mulf %3, %72 : vector<16x16xf32>
    %74 = arith.addf %70, %73 : vector<16x16xf32>
    %c3_45 = arith.constant 3 : index
    %c2_46 = arith.constant 2 : index
    %75 = memref.load %arg3[%c3_45, %c2_46] : memref<8x4xf32, #tpu.memory_space<smem>>
    %76 = vector.broadcast %75 : f32 to vector<16x16xf32>
    %77 = arith.mulf %5, %76 : vector<16x16xf32>
    %78 = arith.addf %74, %77 : vector<16x16xf32>
    %c3_47 = arith.constant 3 : index
    %c3_48 = arith.constant 3 : index
    %79 = memref.load %arg3[%c3_47, %c3_48] : memref<8x4xf32, #tpu.memory_space<smem>>
    %80 = vector.broadcast %79 : f32 to vector<16x16xf32>
    %81 = arith.mulf %7, %80 : vector<16x16xf32>
    %82 = arith.addf %78, %81 : vector<16x16xf32>
    %c3_49 = arith.constant 3 : index
    %83 = memref.load %arg4[%c3_49] : memref<8xf32, #tpu.memory_space<smem>>
    %84 = vector.broadcast %83 : f32 to vector<16x16xf32>
    %85 = arith.addf %82, %84 : vector<16x16xf32>
    %cst_50 = arith.constant 0.000000e+00 : f32
    %86 = vector.broadcast %cst_50 : f32 to vector<16x16xf32>
    %87 = arith.maximumf %85, %86 : vector<16x16xf32>
    %c4 = arith.constant 4 : index
    %c0_51 = arith.constant 0 : index
    %88 = memref.load %arg3[%c4, %c0_51] : memref<8x4xf32, #tpu.memory_space<smem>>
    %89 = vector.broadcast %88 : f32 to vector<16x16xf32>
    %90 = arith.mulf %1, %89 : vector<16x16xf32>
    %c4_52 = arith.constant 4 : index
    %c1_53 = arith.constant 1 : index
    %91 = memref.load %arg3[%c4_52, %c1_53] : memref<8x4xf32, #tpu.memory_space<smem>>
    %92 = vector.broadcast %91 : f32 to vector<16x16xf32>
    %93 = arith.mulf %3, %92 : vector<16x16xf32>
    %94 = arith.addf %90, %93 : vector<16x16xf32>
    %c4_54 = arith.constant 4 : index
    %c2_55 = arith.constant 2 : index
    %95 = memref.load %arg3[%c4_54, %c2_55] : memref<8x4xf32, #tpu.memory_space<smem>>
    %96 = vector.broadcast %95 : f32 to vector<16x16xf32>
    %97 = arith.mulf %5, %96 : vector<16x16xf32>
    %98 = arith.addf %94, %97 : vector<16x16xf32>
    %c4_56 = arith.constant 4 : index
    %c3_57 = arith.constant 3 : index
    %99 = memref.load %arg3[%c4_56, %c3_57] : memref<8x4xf32, #tpu.memory_space<smem>>
    %100 = vector.broadcast %99 : f32 to vector<16x16xf32>
    %101 = arith.mulf %7, %100 : vector<16x16xf32>
    %102 = arith.addf %98, %101 : vector<16x16xf32>
    %c4_58 = arith.constant 4 : index
    %103 = memref.load %arg4[%c4_58] : memref<8xf32, #tpu.memory_space<smem>>
    %104 = vector.broadcast %103 : f32 to vector<16x16xf32>
    %105 = arith.addf %102, %104 : vector<16x16xf32>
    %cst_59 = arith.constant 0.000000e+00 : f32
    %106 = vector.broadcast %cst_59 : f32 to vector<16x16xf32>
    %107 = arith.maximumf %105, %106 : vector<16x16xf32>
    %c5 = arith.constant 5 : index
    %c0_60 = arith.constant 0 : index
    %108 = memref.load %arg3[%c5, %c0_60] : memref<8x4xf32, #tpu.memory_space<smem>>
    %109 = vector.broadcast %108 : f32 to vector<16x16xf32>
    %110 = arith.mulf %1, %109 : vector<16x16xf32>
    %c5_61 = arith.constant 5 : index
    %c1_62 = arith.constant 1 : index
    %111 = memref.load %arg3[%c5_61, %c1_62] : memref<8x4xf32, #tpu.memory_space<smem>>
    %112 = vector.broadcast %111 : f32 to vector<16x16xf32>
    %113 = arith.mulf %3, %112 : vector<16x16xf32>
    %114 = arith.addf %110, %113 : vector<16x16xf32>
    %c5_63 = arith.constant 5 : index
    %c2_64 = arith.constant 2 : index
    %115 = memref.load %arg3[%c5_63, %c2_64] : memref<8x4xf32, #tpu.memory_space<smem>>
    %116 = vector.broadcast %115 : f32 to vector<16x16xf32>
    %117 = arith.mulf %5, %116 : vector<16x16xf32>
    %118 = arith.addf %114, %117 : vector<16x16xf32>
    %c5_65 = arith.constant 5 : index
    %c3_66 = arith.constant 3 : index
    %119 = memref.load %arg3[%c5_65, %c3_66] : memref<8x4xf32, #tpu.memory_space<smem>>
    %120 = vector.broadcast %119 : f32 to vector<16x16xf32>
    %121 = arith.mulf %7, %120 : vector<16x16xf32>
    %122 = arith.addf %118, %121 : vector<16x16xf32>
    %c5_67 = arith.constant 5 : index
    %123 = memref.load %arg4[%c5_67] : memref<8xf32, #tpu.memory_space<smem>>
    %124 = vector.broadcast %123 : f32 to vector<16x16xf32>
    %125 = arith.addf %122, %124 : vector<16x16xf32>
    %cst_68 = arith.constant 0.000000e+00 : f32
    %126 = vector.broadcast %cst_68 : f32 to vector<16x16xf32>
    %127 = arith.maximumf %125, %126 : vector<16x16xf32>
    %c6 = arith.constant 6 : index
    %c0_69 = arith.constant 0 : index
    %128 = memref.load %arg3[%c6, %c0_69] : memref<8x4xf32, #tpu.memory_space<smem>>
    %129 = vector.broadcast %128 : f32 to vector<16x16xf32>
    %130 = arith.mulf %1, %129 : vector<16x16xf32>
    %c6_70 = arith.constant 6 : index
    %c1_71 = arith.constant 1 : index
    %131 = memref.load %arg3[%c6_70, %c1_71] : memref<8x4xf32, #tpu.memory_space<smem>>
    %132 = vector.broadcast %131 : f32 to vector<16x16xf32>
    %133 = arith.mulf %3, %132 : vector<16x16xf32>
    %134 = arith.addf %130, %133 : vector<16x16xf32>
    %c6_72 = arith.constant 6 : index
    %c2_73 = arith.constant 2 : index
    %135 = memref.load %arg3[%c6_72, %c2_73] : memref<8x4xf32, #tpu.memory_space<smem>>
    %136 = vector.broadcast %135 : f32 to vector<16x16xf32>
    %137 = arith.mulf %5, %136 : vector<16x16xf32>
    %138 = arith.addf %134, %137 : vector<16x16xf32>
    %c6_74 = arith.constant 6 : index
    %c3_75 = arith.constant 3 : index
    %139 = memref.load %arg3[%c6_74, %c3_75] : memref<8x4xf32, #tpu.memory_space<smem>>
    %140 = vector.broadcast %139 : f32 to vector<16x16xf32>
    %141 = arith.mulf %7, %140 : vector<16x16xf32>
    %142 = arith.addf %138, %141 : vector<16x16xf32>
    %c6_76 = arith.constant 6 : index
    %143 = memref.load %arg4[%c6_76] : memref<8xf32, #tpu.memory_space<smem>>
    %144 = vector.broadcast %143 : f32 to vector<16x16xf32>
    %145 = arith.addf %142, %144 : vector<16x16xf32>
    %cst_77 = arith.constant 0.000000e+00 : f32
    %146 = vector.broadcast %cst_77 : f32 to vector<16x16xf32>
    %147 = arith.maximumf %145, %146 : vector<16x16xf32>
    %c7 = arith.constant 7 : index
    %c0_78 = arith.constant 0 : index
    %148 = memref.load %arg3[%c7, %c0_78] : memref<8x4xf32, #tpu.memory_space<smem>>
    %149 = vector.broadcast %148 : f32 to vector<16x16xf32>
    %150 = arith.mulf %1, %149 : vector<16x16xf32>
    %c7_79 = arith.constant 7 : index
    %c1_80 = arith.constant 1 : index
    %151 = memref.load %arg3[%c7_79, %c1_80] : memref<8x4xf32, #tpu.memory_space<smem>>
    %152 = vector.broadcast %151 : f32 to vector<16x16xf32>
    %153 = arith.mulf %3, %152 : vector<16x16xf32>
    %154 = arith.addf %150, %153 : vector<16x16xf32>
    %c7_81 = arith.constant 7 : index
    %c2_82 = arith.constant 2 : index
    %155 = memref.load %arg3[%c7_81, %c2_82] : memref<8x4xf32, #tpu.memory_space<smem>>
    %156 = vector.broadcast %155 : f32 to vector<16x16xf32>
    %157 = arith.mulf %5, %156 : vector<16x16xf32>
    %158 = arith.addf %154, %157 : vector<16x16xf32>
    %c7_83 = arith.constant 7 : index
    %c3_84 = arith.constant 3 : index
    %159 = memref.load %arg3[%c7_83, %c3_84] : memref<8x4xf32, #tpu.memory_space<smem>>
    %160 = vector.broadcast %159 : f32 to vector<16x16xf32>
    %161 = arith.mulf %7, %160 : vector<16x16xf32>
    %162 = arith.addf %158, %161 : vector<16x16xf32>
    %c7_85 = arith.constant 7 : index
    %163 = memref.load %arg4[%c7_85] : memref<8xf32, #tpu.memory_space<smem>>
    %164 = vector.broadcast %163 : f32 to vector<16x16xf32>
    %165 = arith.addf %162, %164 : vector<16x16xf32>
    %cst_86 = arith.constant 0.000000e+00 : f32
    %166 = vector.broadcast %cst_86 : f32 to vector<16x16xf32>
    %167 = arith.maximumf %165, %166 : vector<16x16xf32>
    %168 = tpu.concatenate %27, %47, %67, %87, %107, %127, %147, %167 in 0 : vector<16x16xf32>, vector<16x16xf32>, vector<16x16xf32>, vector<16x16xf32>, vector<16x16xf32>, vector<16x16xf32>, vector<16x16xf32>, vector<16x16xf32> -> vector<128x16xf32>
    %169 = tpu.transpose %168, [1, 0] : vector<128x16xf32> -> vector<16x128xf32>
    %c0_87 = arith.constant 0 : index
    %c0_88 = arith.constant 0 : index
    %c0_89 = arith.constant 0 : index
    %170 = vector.load %arg5[%c0_87, %c0_88, %c0_89] : memref<1x16x128xf32, #tpu.memory_space<vmem>>, vector<1x16x128xf32>
    %171 = vector.shape_cast %170 : vector<1x16x128xf32> to vector<16x128xf32>
    %172 = vector.shape_cast %169 : vector<16x128xf32> to vector<1x16x128xf32>
    tpu.vector_store %arg5[%c0_87, %c0_88, %c0_89], %172 {strides = array<i32>} : memref<1x16x128xf32, #tpu.memory_space<vmem>>, vector<1x16x128xf32>,
    return
  }
  func.func @transform_0(%arg0: i32, %arg1: i32) -> (i32, i32, i32, i32) {
    %c0_i32 = arith.constant 0 : i32
    %c0_i32_0 = arith.constant 0 : i32
    %c0_i32_1 = arith.constant 0 : i32
    return %arg0, %c0_i32, %c0_i32_0, %arg1 : i32, i32, i32, i32
  }
  func.func @transform_1(%arg0: i32, %arg1: i32) -> (i32, i32) {
    %c0_i32 = arith.constant 0 : i32
    %c0_i32_0 = arith.constant 0 : i32
    %c0_i32_1 = arith.constant 0 : i32
    return %c0_i32, %c0_i32_0 : i32, i32
  }
  func.func @transform_2(%arg0: i32, %arg1: i32) -> i32 {
    %c0_i32 = arith.constant 0 : i32
    %c0_i32_0 = arith.constant 0 : i32
    return %c0_i32 : i32
  }
  func.func @transform_3(%arg0: i32, %arg1: i32) -> (i32, i32, i32) {
    %c0_i32 = arith.constant 0 : i32
    %c0_i32_0 = arith.constant 0 : i32
    return %arg0, %arg1, %c0_i32 : i32, i32, i32
  }
}

</mosaic_0001>

<llo_original>
// kernel: channel_mlp.1
$region0: #{channel_mlp.1}
  #allocation0 [shape = 'u32[]', space=smem, size = 0x4, offset = 0x4, fixed_abs, tag = 'smem constant byte address 0x4 - core index']
  #allocation1 [shape = 'u32[144,128]{1,0:T(1,128)}', space=vmem, size = 0x12000, scoped, tag = 'internal scratch']
  %s0 = inlined_call_operand.hbm [shape: f32[2,4,16,16], index: 0, kind: input, shape index: {}]
  %s1 = inlined_call_operand.vmem [shape: f32[8,4], index: 1, kind: input, shape index: {}]
  %s2 = inlined_call_operand.vmem [shape: f32[8], index: 2, kind: input, shape index: {}]
  %s3 = inlined_call_operand.vmem [shape: f32[2,16,128], index: 3, kind: output, shape index: {}]
  %s4 = sld [smem:[#allocation0]]
  $region57: #{channel_mlp.1} parent=0
    _
  %s6 = ssub.s32 1, %s4
  %s7 = scalar_select 0, %s6, %s4
  $region1: #{channel_mlp.1} parent=0
    #allocation2 [shape = 'u8[65536]{0}', space=vmem, size = 0x10000, scoped, tag = 'input window, operand 0']
    #allocation3 [shape = 's32[2]{0}', space=sflag, size = 0x8, scoped, tag = 'scoped memory for channel_mlp.1']
    #allocation4 [shape = 's32[2]{0}', space=sflag, size = 0x8, scoped, tag = 'scoped memory for channel_mlp.1']
    #allocation5 [shape = 'u8[4096]{0}', space=smem, size = 0x1000, scoped, tag = 'input window, operand 1, single buffered']
    #allocation6 [shape = 'u8[512]{0}', space=smem, size = 0x200, scoped, tag = 'input window, operand 2, single buffered']
    #allocation7 [shape = 's32[1]{0}', space=sflag, size = 0x4, scoped, tag = 'scoped memory for channel_mlp.1']
    %8 = vsyncpa [#allocation3], 0
    %s9 = scalar_lea.sflag [#allocation3], 1
    %10 = vsyncpa %s9, 0
    %11 = vsyncpa [#allocation4], 0
    %12 = vsyncpa [#allocation7], 0
    loop: start=0, step=1, limit=4
    $region2: #{channel_mlp.1} parent=1 // loop_pre_header
      _
    $region3: #{channel_mlp.1} parent=1 // loop_header
      %s14 = sphi 0, %s18
      %p15 = scmp.ge.s32.totalorder %s14, 4
      %s21 = sphi 0, %s33
      %s22 = sphi 0, %s29
      %s23 = sphi 0, %s21
      %s24 = sphi 0, %s22
      %s25 = sphi 0, %s23
      %s26 = sphi 0, %s24
      %s38 = sphi 0, %s40
      %s41 = sphi 0, %s38
      %s42 = sphi 0, %s41
      %s58 = sphi 0, %s42
      %s62 = sphi 0, %s62
      %s64 = sphi 0, %s62
      %s65 = sphi 0, %s64
      %s79 = sphi 0, %s65
      %s83 = sphi 0, %s83
      %s85 = sphi 0, %s83
      %s86 = sphi 0, %s85
      %s100 = sphi 0, %s86
      %s108 = sphi 0, %s110
      %s111 = sphi 0, %s108
      %s112 = sphi 0, %s111
      %s128 = sphi 0, %s112
    $region4: #{channel_mlp.1} parent=1 // loop_header_branch
      %17 = sbr.rel (%p15) target = $region8
    $region5: #{channel_mlp.1} parent=1 // loop_body
      %s19 = ssub.s32 %s14, 1
      %s20 = ssub.s32 %s14, 2
      %s27 = sadd.s32 1, %s22
      %p28 = scmp.ge.s32.totalorder %s27, 1
      %s29 = scalar_select %p28, 0, %s27
      %s30 = sadd.s32 1, %s21
      %s31 = scalar_select %p28, %s30, %s21
      %p32 = scmp.ge.s32.totalorder %s31, 2
      %s33 = scalar_select %p32, 0, %s31
      %s34 = ssub.s32 %s21, %s33
      %s35 = ssub.s32 %s22, %s29
      %s36 = sor.u32 %s34, %s35
      %p37 = scmp.eq.s32.totalorder %s36, 0
      %s39 = sadd.s32 %s38, 1
      %s40 = scalar_select %p37, %s38, %s39
      %p43 = pneg %p37
      %p44 = scmp.eq.s32.totalorder %s14, 1
      %p45 = por %p43, %p44
      %p46 = scmp.ne.s32.totalorder %s38, %s41
      %p47 = scmp.eq.s32.totalorder %s14, 0
      %p48 = por %p46, %p47
      %p49 = scmp.ne.s32.totalorder %s38, %s41
      %p50 = scmp.eq.s32.totalorder %s19, 1
      %p51 = por %p49, %p50
      %p52 = scmp.ne.s32.totalorder %s41, %s42
      %p53 = scmp.eq.s32.totalorder %s19, 0
      %p54 = por %p52, %p53
      %p55 = scmp.ne.s32.totalorder %s41, %s42
      %p56 = scmp.eq.s32.totalorder %s20, 1
      %p57 = por %p55, %p56
      %p59 = scmp.ne.s32.totalorder %s42, %s58
      %p60 = scmp.eq.s32.totalorder %s20, 0
      %p61 = por %p59, %p60
      %s63 = sadd.s32 %s62, 1
      %p66 = scmp.eq.s32.totalorder %s14, 1
      %p67 = scmp.ne.s32.totalorder %s62, %s64
      %p68 = scmp.eq.s32.totalorder %s14, 0
      %p69 = por %p67, %p68
      %p70 = scmp.ne.s32.totalorder %s62, %s64
      %p71 = scmp.eq.s32.totalorder %s19, 1
      %p72 = por %p70, %p71
      %p73 = scmp.ne.s32.totalorder %s64, %s65
      %p74 = scmp.eq.s32.totalorder %s19, 0
      %p75 = por %p73, %p74
      %p76 = scmp.ne.s32.totalorder %s64, %s65
      %p77 = scmp.eq.s32.totalorder %s20, 1
      %p78 = por %p76, %p77
      %p80 = scmp.ne.s32.totalorder %s65, %s79
      %p81 = scmp.eq.s32.totalorder %s20, 0
      %p82 = por %p80, %p81
      %s84 = sadd.s32 %s83, 1
      %p87 = scmp.eq.s32.totalorder %s14, 1
      %p88 = scmp.ne.s32.totalorder %s83, %s85
      %p89 = scmp.eq.s32.totalorder %s14, 0
      %p90 = por %p88, %p89
      %p91 = scmp.ne.s32.totalorder %s83, %s85
      %p92 = scmp.eq.s32.totalorder %s19, 1
      %p93 = por %p91, %p92
      %p94 = scmp.ne.s32.totalorder %s85, %s86
      %p95 = scmp.eq.s32.totalorder %s19, 0
      %p96 = por %p94, %p95
      %p97 = scmp.ne.s32.totalorder %s85, %s86
      %p98 = scmp.eq.s32.totalorder %s20, 1
      %p99 = por %p97, %p98
      %p101 = scmp.ne.s32.totalorder %s86, %s100
      %p102 = scmp.eq.s32.totalorder %s20, 0
      %p103 = por %p101, %p102
      %s104 = ssub.s32 %s21, %s33
      %s105 = ssub.s32 %s22, %s29
      %s106 = sor.u32 %s104, %s105
      %p107 = scmp.eq.s32.totalorder %s106, 0
      %s109 = sadd.s32 %s108, 1
      %s110 = scalar_select %p107, %s108, %s109
      %p113 = pneg %p107
      %p114 = scmp.eq.s32.totalorder %s14, 1
      %p115 = por %p113, %p114
      %p116 = scmp.ne.s32.totalorder %s108, %s111
      %p117 = scmp.eq.s32.totalorder %s14, 0
      %p118 = por %p116, %p117
      %p119 = scmp.ne.s32.totalorder %s108, %s111
      %p120 = scmp.eq.s32.totalorder %s19, 1
      %p121 = por %p119, %p120
      %p122 = scmp.ne.s32.totalorder %s111, %s112
      %p123 = scmp.eq.s32.totalorder %s19, 0
      %p124 = por %p122, %p123
      %p125 = scmp.ne.s32.totalorder %s111, %s112
      %p126 = scmp.eq.s32.totalorder %s20, 1
      %p127 = por %p125, %p126
      %p129 = scmp.ne.s32.totalorder %s112, %s128
      %p130 = scmp.eq.s32.totalorder %s20, 0
      %p131 = por %p129, %p130
      %p132 = scmp.le.s32.totalorder 1, %s14
      %p133 = scmp.lt.s32.totalorder %s14, 3
      %p134 = pnand %p132, %p133
      %p135 = pneg %p134
      // Predicated region
      $region9: #{channel_mlp.1} parent=5 // pred_check
        _
      $region10: #{channel_mlp.1} parent=5 // pred_check_branch
        %137 = sbr.rel (%p134) target = $region12
      $region11: #{channel_mlp.1} parent=5 // pred_region
        %s138 = ssub.s32 %s14, 1
        // Predicated region
        $region13: #{channel_mlp.1} parent=11 // pred_check
          %p139 = pneg %p75
        $region14: #{channel_mlp.1} parent=11 // pred_check_branch
          %141 = sbr.rel (%p139) target = $region16
        $region15: #{channel_mlp.1} parent=11 // pred_region
          %s143 = ssub.s32 128, 128
          %144 = vsyncadd [#allocation4], %s143
          %s146 = sshll.u32 %s1, 4
          %s147 = int_to_ptr.vmem [resolvable:$true] %s146
          %149 = dma.vmem_to_smem %s147, 128, [#allocation5], [#allocation4]
        $region16: #{channel_mlp.1} parent=11 // pred_fallthru
          _
        // Predicated region
        $region17: #{channel_mlp.1} parent=11 // pred_check
          %p150 = pneg %p96
        $region18: #{channel_mlp.1} parent=11 // pred_check_branch
          %152 = sbr.rel (%p150) target = $region20
        $region19: #{channel_mlp.1} parent=11 // pred_region
          %s154 = ssub.s32 16, 16
          %155 = vsyncadd [#allocation7], %s154
          %s157 = sshll.u32 %s2, 4
          %s158 = int_to_ptr.vmem [resolvable:$true] %s157
          %160 = dma.vmem_to_smem %s158, 16, [#allocation6], [#allocation7]
        $region20: #{channel_mlp.1} parent=11 // pred_fallthru
          _
      $region12: #{channel_mlp.1} parent=5 // pred_fallthru
        _
      %p161 = scmp.lt.s32.totalorder %s14, 2
      // Predicated region
      $region21: #{channel_mlp.1} parent=5 // pred_check
        %p162 = pneg %p161
      $region22: #{channel_mlp.1} parent=5 // pred_check_branch
        %164 = sbr.rel (%p162) target = $region24
      $region23: #{channel_mlp.1} parent=5 // pred_region
        // Predicated region
        $region25: #{channel_mlp.1} parent=23 // pred_check
          %p165 = pneg %p48
        $region26: #{channel_mlp.1} parent=23 // pred_check_branch
          %167 = sbr.rel (%p165) target = $region28
        $region27: #{channel_mlp.1} parent=23 // pred_region
          %s168 = sand.u32 %s38, 1
          %s169 = scalar_lea.sflag [#allocation3], %s168
          %s170 = sand.u32 %s38, 1
          %s171 = smul.addr %s170, 64
          %s172 = scalar_lea.vmem [#allocation2], %s171
          %s174 = ssub.s32 1024, 1024
          %175 = vsyncadd %s169, %s174
          %s176 = smul.addr %s21, 8
          %s177 = sadd.s32 %s22, %s176
          %s178 = smul.addr %s177, 128
          %s179 = scalar_lea.hbm %s0, %s178
          %s180 = sshll.u32 %s172, 4
          %s181 = int_to_ptr.vmem [resolvable:$true] %s180
          %186 = dma.hbm_to_vmem [thread:$0]  %s179, 1024, %s181, %s169, 128, 128, 8
        $region28: #{channel_mlp.1} parent=23 // pred_fallthru
          _
      $region24: #{channel_mlp.1} parent=5 // pred_fallthru
        _
      %p187 = scmp.le.s32.totalorder 1, %s14
      %p188 = scmp.lt.s32.totalorder %s14, 3
      %p189 = pnand %p187, %p188
      %p190 = pneg %p189
      // Predicated region
      $region29: #{channel_mlp.1} parent=5 // pred_check
        _
      $region30: #{channel_mlp.1} parent=5 // pred_check_branch
        %192 = sbr.rel (%p189) target = $region32
      $region31: #{channel_mlp.1} parent=5 // pred_region
        %s193 = ssub.s32 %s14, 1
        %s194 = sand.u32 %s41, 1
        %s195 = scalar_lea.sflag [#allocation3], %s194
        %s196 = sand.u32 %s41, 1
        %s197 = smul.addr %s196, 64
        %s198 = scalar_lea.vmem [#allocation2], %s197
        // Predicated region
        $region33: #{channel_mlp.1} parent=31 // pred_check
          %p199 = pneg %p54
        $region34: #{channel_mlp.1} parent=31 // pred_check_branch
          %201 = sbr.rel (%p199) target = $region36
        $region35: #{channel_mlp.1} parent=31 // pred_region
          %202 = dma.done %s195, 1024
        $region36: #{channel_mlp.1} parent=31 // pred_fallthru
          _
        // Predicated region
        $region37: #{channel_mlp.1} parent=31 // pred_check
          %p203 = pneg %p75
        $region38: #{channel_mlp.1} parent=31 // pred_check_branch
          %205 = sbr.rel (%p203) target = $region40
        $region39: #{channel_mlp.1} parent=31 // pred_region
          %206 = dma.done [#allocation4], 128
        $region40: #{channel_mlp.1} parent=31 // pred_fallthru
          _
        // Predicated region
        $region41: #{channel_mlp.1} parent=31 // pred_check
          %p207 = pneg %p96
        $region42: #{channel_mlp.1} parent=31 // pred_check_branch
          %209 = sbr.rel (%p207) target = $region44
        $region43: #{channel_mlp.1} parent=31 // pred_region
          %210 = dma.done [#allocation7], 16
        $region44: #{channel_mlp.1} parent=31 // pred_fallthru
          _
        %211 = sfence
        %s212 = sand.u32 %s41, 1
        %s213 = scalar_lea.sflag [#allocation3], %s212
        %s214 = sand.u32 %s41, 1
        %s215 = smul.addr %s214, 64
        %s216 = scalar_lea.vmem [#allocation2], %s215
        %p217 = pneg %p54
        %p218 = pneg %p51
        %p219 = pneg %p75
        %p220 = pneg %p72
        %p221 = pneg %p96
        %p222 = pneg %p93
        %p223 = pneg %p124
        %p224 = pneg %p121
        %s225 = smul.u32 2, %s24
        %p226 = scmp.lt.s32.totalorder %s23, 1
        %s227 = scalar_select %p226, %s23, 1
        %p228 = scmp.lt.s32.totalorder %s225, 1
        %s229 = scalar_select %p228, %s225, 1
        %s230 = smul.addr %s227, 2
        %s231 = sadd.s32 %s229, %s230
        %s232 = smul.addr %s231, 8
        %s233 = scalar_lea.vmem %s3, %s232
        %s234 = smul.u32 2, %s24
        %p235 = scmp.lt.s32.totalorder %s23, 1
        %s236 = scalar_select %p235, %s23, 1
        %p237 = scmp.lt.s32.totalorder %s234, 1
        %s238 = scalar_select %p237, %s234, 1
        %s239 = smul.addr %s236, 2
        %s240 = sadd.s32 %s238, %s239
        %s241 = smul.addr %s240, 8
        %s242 = scalar_lea.vmem %s3, %s241
        %s243 = smul.u32 2, %s24
        %v244 = vld [vmem:[%s198] sm:$0xff]
        %v245 = vld [vmem:[%s198 + $0x8] sm:$0xff]
        %s246 = scalar_lea.vmem %s198, 16 [#allocation2]
        %v247 = vld [vmem:[%s246] sm:$0xff]
        %v248 = vld [vmem:[%s246 + $0x8] sm:$0xff]
        %s249 = scalar_lea.vmem %s198, 32 [#allocation2]
        %v250 = vld [vmem:[%s249] sm:$0xff]
        %v251 = vld [vmem:[%s249 + $0x8] sm:$0xff]
        %s252 = scalar_lea.vmem %s198, 48 [#allocation2]
        %v253 = vld [vmem:[%s252] sm:$0xff]
        %v254 = vld [vmem:[%s252 + $0x8] sm:$0xff]
        %s255 = sld [smem:[#allocation5]]
        %v256 = vstv %s255
        %v257 = vmul.f32 %v244, %v256
        %v258 = vmul.f32 %v245, %v256
        %s259 = sld [smem:[#allocation5 + $0x1]]
        %v260 = vstv %s259
        %v261 = vmul.f32 %v247, %v260
        %v262 = vmul.f32 %v248, %v260
        %v263 = vadd.f32 %v257, %v261
        %v264 = vadd.f32 %v258, %v262
        %s265 = sld [smem:[#allocation5 + $0x2]]
        %v266 = vstv %s265
        %v267 = vmul.f32 %v250, %v266
        %v268 = vmul.f32 %v251, %v266
        %v269 = vadd.f32 %v263, %v267
        %v270 = vadd.f32 %v264, %v268
        %s271 = sld [smem:[#allocation5 + $0x3]]
        %v272 = vstv %s271
        %v273 = vmul.f32 %v253, %v272
        %v274 = vmul.f32 %v254, %v272
        %v275 = vadd.f32 %v269, %v273
        %v276 = vadd.f32 %v270, %v274
        %s277 = sld [smem:[#allocation6]]
        %v278 = vstv %s277
        %v279 = vadd.f32 %v275, %v278
        %v280 = vadd.f32 %v276, %v278
        %v281 = vmax.f32 %v279, 0.0
        %v282 = vmax.f32 %v280, 0.0
        %s283 = sld [smem:[#allocation5 + $0x80]]
        %v284 = vstv %s283
        %v285 = vmul.f32 %v244, %v284
        %v286 = vmul.f32 %v245, %v284
        %s287 = sld [smem:[#allocation5 + $0x81]]
        %v288 = vstv %s287
        %v289 = vmul.f32 %v247, %v288
        %v290 = vmul.f32 %v248, %v288
        %v291 = vadd.f32 %v285, %v289
        %v292 = vadd.f32 %v286, %v290
        %s293 = sld [smem:[#allocation5 + $0x82]]
        %v294 = vstv %s293
        %v295 = vmul.f32 %v250, %v294
        %v296 = vmul.f32 %v251, %v294
        %v297 = vadd.f32 %v291, %v295
        %v298 = vadd.f32 %v292, %v296
        %s299 = sld [smem:[#allocation5 + $0x83]]
        %v300 = vstv %s299
        %v301 = vmul.f32 %v253, %v300
        %v302 = vmul.f32 %v254, %v300
        %v303 = vadd.f32 %v297, %v301
        %v304 = vadd.f32 %v298, %v302
        %s305 = sld [smem:[#allocation6 + $0x1]]
        %v306 = vstv %s305
        %v307 = vadd.f32 %v303, %v306
        %v308 = vadd.f32 %v304, %v306
        %v309 = vmax.f32 %v307, 0.0
        %v310 = vmax.f32 %v308, 0.0
        %s311 = sld [smem:[#allocation5 + $0x100]]
        %v312 = vstv %s311
        %v313 = vmul.f32 %v244, %v312
        %v314 = vmul.f32 %v245, %v312
        %s315 = sld [smem:[#allocation5 + $0x101]]
        %v316 = vstv %s315
        %v317 = vmul.f32 %v247, %v316
        %v318 = vmul.f32 %v248, %v316
        %v319 = vadd.f32 %v313, %v317
        %v320 = vadd.f32 %v314, %v318
        %s321 = sld [smem:[#allocation5 + $0x102]]
        %v322 = vstv %s321
        %v323 = vmul.f32 %v250, %v322
        %v324 = vmul.f32 %v251, %v322
        %v325 = vadd.f32 %v319, %v323
        %v326 = vadd.f32 %v320, %v324
        %s327 = sld [smem:[#allocation5 + $0x103]]
        %v328 = vstv %s327
        %v329 = vmul.f32 %v253, %v328
        %v330 = vmul.f32 %v254, %v328
        %v331 = vadd.f32 %v325, %v329
        %v332 = vadd.f32 %v326, %v330
        %s333 = sld [smem:[#allocation6 + $0x2]]
        %v334 = vstv %s333
        %v335 = vadd.f32 %v331, %v334
        %v336 = vadd.f32 %v332, %v334
        %v337 = vmax.f32 %v335, 0.0
        %v338 = vmax.f32 %v336, 0.0
        %s339 = sld [smem:[#allocation5 + $0x180]]
        %v340 = vstv %s339
        %v341 = vmul.f32 %v244, %v340
        %v342 = vmul.f32 %v245, %v340
        %s343 = sld [smem:[#allocation5 + $0x181]]
        %v344 = vstv %s343
        %v345 = vmul.f32 %v247, %v344
        %v346 = vmul.f32 %v248, %v344
        %v347 = vadd.f32 %v341, %v345
        %v348 = vadd.f32 %v342, %v346
        %s349 = sld [smem:[#allocation5 + $0x182]]
        %v350 = vstv %s349
        %v351 = vmul.f32 %v250, %v350
        %v352 = vmul.f32 %v251, %v350
        %v353 = vadd.f32 %v347, %v351
        %v354 = vadd.f32 %v348, %v352
        %s355 = sld [smem:[#allocation5 + $0x183]]
        %v356 = vstv %s355
        %v357 = vmul.f32 %v253, %v356
        %v358 = vmul.f32 %v254, %v356
        %v359 = vadd.f32 %v353, %v357
        %v360 = vadd.f32 %v354, %v358
        %s361 = sld [smem:[#allocation6 + $0x3]]
        %v362 = vstv %s361
        %v363 = vadd.f32 %v359, %v362
        %v364 = vadd.f32 %v360, %v362
        %v365 = vmax.f32 %v363, 0.0
        %v366 = vmax.f32 %v364, 0.0
        %s367 = sld [smem:[#allocation5 + $0x200]]
        %v368 = vstv %s367
        %v369 = vmul.f32 %v244, %v368
        %v370 = vmul.f32 %v245, %v368
        %s371 = sld [smem:[#allocation5 + $0x201]]
        %v372 = vstv %s371
        %v373 = vmul.f32 %v247, %v372
        %v374 = vmul.f32 %v248, %v372
        %v375 = vadd.f32 %v369, %v373
        %v376 = vadd.f32 %v370, %v374
        %s377 = sld [smem:[#allocation5 + $0x202]]
        %v378 = vstv %s377
        %v379 = vmul.f32 %v250, %v378
        %v380 = vmul.f32 %v251, %v378
        %v381 = vadd.f32 %v375, %v379
        %v382 = vadd.f32 %v376, %v380
        %s383 = sld [smem:[#allocation5 + $0x203]]
        %v384 = vstv %s383
        %v385 = vmul.f32 %v253, %v384
        %v386 = vmul.f32 %v254, %v384
        %v387 = vadd.f32 %v381, %v385
        %v388 = vadd.f32 %v382, %v386
        %s389 = sld [smem:[#allocation6 + $0x4]]
        %v390 = vstv %s389
        %v391 = vadd.f32 %v387, %v390
        %v392 = vadd.f32 %v388, %v390
        %v393 = vmax.f32 %v391, 0.0
        %v394 = vmax.f32 %v392, 0.0
        %s395 = sld [smem:[#allocation5 + $0x280]]
        %v396 = vstv %s395
        %v397 = vmul.f32 %v244, %v396
        %v398 = vmul.f32 %v245, %v396
        %s399 = sld [smem:[#allocation5 + $0x281]]
        %v400 = vstv %s399
        %v401 = vmul.f32 %v247, %v400
        %v402 = vmul.f32 %v248, %v400
        %v403 = vadd.f32 %v397, %v401
        %v404 = vadd.f32 %v398, %v402
        %s405 = sld [smem:[#allocation5 + $0x282]]
        %v406 = vstv %s405
        %v407 = vmul.f32 %v250, %v406
        %v408 = vmul.f32 %v251, %v406
        %v409 = vadd.f32 %v403, %v407
        %v410 = vadd.f32 %v404, %v408
        %s411 = sld [smem:[#allocation5 + $0x283]]
        %v412 = vstv %s411
        %v413 = vmul.f32 %v253, %v412
        %v414 = vmul.f32 %v254, %v412
        %v415 = vadd.f32 %v409, %v413
        %v416 = vadd.f32 %v410, %v414
        %s417 = sld [smem:[#allocation6 + $0x5]]
        %v418 = vstv %s417
        %v419 = vadd.f32 %v415, %v418
        %v420 = vadd.f32 %v416, %v418
        %v421 = vmax.f32 %v419, 0.0
        %v422 = vmax.f32 %v420, 0.0
        %s423 = sld [smem:[#allocation5 + $0x300]]
        %v424 = vstv %s423
        %v425 = vmul.f32 %v244, %v424
        %v426 = vmul.f32 %v245, %v424
        %s427 = sld [smem:[#allocation5 + $0x301]]
        %v428 = vstv %s427
        %v429 = vmul.f32 %v247, %v428
        %v430 = vmul.f32 %v248, %v428
        %v431 = vadd.f32 %v425, %v429
        %v432 = vadd.f32 %v426, %v430
        %s433 = sld [smem:[#allocation5 + $0x302]]
        %v434 = vstv %s433
        %v435 = vmul.f32 %v250, %v434
        %v436 = vmul.f32 %v251, %v434
        %v437 = vadd.f32 %v431, %v435
        %v438 = vadd.f32 %v432, %v436
        %s439 = sld [smem:[#allocation5 + $0x303]]
        %v440 = vstv %s439
        %v441 = vmul.f32 %v253, %v440
        %v442 = vmul.f32 %v254, %v440
        %v443 = vadd.f32 %v437, %v441
        %v444 = vadd.f32 %v438, %v442
        %s445 = sld [smem:[#allocation6 + $0x6]]
        %v446 = vstv %s445
        %v447 = vadd.f32 %v443, %v446
        %v448 = vadd.f32 %v444, %v446
        %v449 = vmax.f32 %v447, 0.0
        %v450 = vmax.f32 %v448, 0.0
        %s451 = sld [smem:[#allocation5 + $0x380]]
        %v452 = vstv %s451
        %v453 = vmul.f32 %v244, %v452
        %v454 = vmul.f32 %v245, %v452
        %s455 = sld [smem:[#allocation5 + $0x381]]
        %v456 = vstv %s455
        %v457 = vmul.f32 %v247, %v456
        %v458 = vmul.f32 %v248, %v456
        %v459 = vadd.f32 %v453, %v457
        %v460 = vadd.f32 %v454, %v458
        %s461 = sld [smem:[#allocation5 + $0x382]]
        %v462 = vstv %s461
        %v463 = vmul.f32 %v250, %v462
        %v464 = vmul.f32 %v251, %v462
        %v465 = vadd.f32 %v459, %v463
        %v466 = vadd.f32 %v460, %v464
        %s467 = sld [smem:[#allocation5 + $0x383]]
        %v468 = vstv %s467
        %v469 = vmul.f32 %v253, %v468
        %v470 = vmul.f32 %v254, %v468
        %v471 = vadd.f32 %v465, %v469
        %v472 = vadd.f32 %v466, %v470
        %s473 = sld [smem:[#allocation6 + $0x7]]
        %v474 = vstv %s473
        %v475 = vadd.f32 %v471, %v474
        %v476 = vadd.f32 %v472, %v474
        %v477 = vmax.f32 %v475, 0.0
        %v478 = vmax.f32 %v476, 0.0
        %479 = vxpose.xlu0.b32.start [1/16] %v281, 128
        %480 = vxpose.xlu0.b32.cont [2/16] %v282, 128
        %481 = vxpose.xlu0.b32.cont [3/16] %v309, 128
        %482 = vxpose.xlu0.b32.cont [4/16] %v310, 128
        %483 = vxpose.xlu0.b32.cont [5/16] %v337, 128
        %484 = vxpose.xlu0.b32.cont [6/16] %v338, 128
        %485 = vxpose.xlu0.b32.cont [7/16] %v365, 128
        %486 = vxpose.xlu0.b32.cont [8/16] %v366, 128
        %487 = vxpose.xlu0.b32.cont [9/16] %v393, 128
        %488 = vxpose.xlu0.b32.cont [10/16] %v394, 128
        %489 = vxpose.xlu0.b32.cont [11/16] %v421, 128
        %490 = vxpose.xlu0.b32.cont [12/16] %v422, 128
        %491 = vxpose.xlu0.b32.cont [13/16] %v449, 128
        %492 = vxpose.xlu0.b32.cont [14/16] %v450, 128
        %493 = vxpose.xlu0.b32.cont [15/16] %v477, 128
        %494 = vxpose.xlu0.b32.end [16/16] %v478, 128
        %v495 = vpop.trf.xlu0
        %v496 = vpop.trf.xlu0
        %v497 = vpop.trf.xlu0
        %v498 = vpop.trf.xlu0
        %v499 = vpop.trf.xlu0
        %v500 = vpop.trf.xlu0
        %v501 = vpop.trf.xlu0
        %v502 = vpop.trf.xlu0
        %v503 = vpop.trf.xlu0
        %v504 = vpop.trf.xlu0
        %v505 = vpop.trf.xlu0
        %v506 = vpop.trf.xlu0
        %v507 = vpop.trf.xlu0
        %v508 = vpop.trf.xlu0
        %v509 = vpop.trf.xlu0
        %v510 = vpop.trf.xlu0
        %511 = vst [vmem:[%s242] sm:$0xff] %v495
        %512 = vst [vmem:[%s242 + $0x8] sm:$0xff] %v496
        %s513 = smul.u32 2, %s24
        %p514 = scmp.lt.s32.totalorder %s23, 1
        %s515 = scalar_select %p514, %s23, 1
        %p516 = scmp.lt.s32.totalorder %s513, 1
        %s517 = scalar_select %p516, %s513, 1
        %s518 = smul.addr %s515, 2
        %s519 = sadd.s32 %s517, %s518
        %s520 = smul.addr %s519, 8
        %s521 = scalar_lea.vmem %s3, %s520
        // Predicated region
        $region45: #{channel_mlp.1} parent=31 // pred_check
          %p522 = pneg %p121
        $region46: #{channel_mlp.1} parent=31 // pred_check_branch
          %524 = sbr.rel (%p522) target = $region48
        $region47: #{channel_mlp.1} parent=31 // pred_region
          %s525 = smul.u32 2, %s24
        $region48: #{channel_mlp.1} parent=31 // pred_fallthru
          _
      $region32: #{channel_mlp.1} parent=5 // pred_fallthru
        _
      %p526 = scmp.le.s32.totalorder 2, %s14
      // Predicated region
      $region49: #{channel_mlp.1} parent=5 // pred_check
        %p527 = pneg %p526
      $region50: #{channel_mlp.1} parent=5 // pred_check_branch
        %529 = sbr.rel (%p527) target = $region52
      $region51: #{channel_mlp.1} parent=5 // pred_region
        %s530 = ssub.s32 %s14, 2
        // Predicated region
        $region53: #{channel_mlp.1} parent=51 // pred_check
          %p531 = pneg %p127
        $region54: #{channel_mlp.1} parent=51 // pred_check_branch
          %533 = sbr.rel (%p531) target = $region56
        $region55: #{channel_mlp.1} parent=51 // pred_region
          %s534 = smul.u32 2, %s26
          %p535 = scmp.lt.s32.totalorder %s25, 1
          %s536 = scalar_select %p535, %s25, 1
          %p537 = scmp.lt.s32.totalorder %s534, 1
          %s538 = scalar_select %p537, %s534, 1
          %s539 = smul.addr %s536, 2
          %s540 = sadd.s32 %s538, %s539
          %s541 = smul.addr %s540, 8
          %s542 = scalar_lea.vmem %s3, %s541
        $region56: #{channel_mlp.1} parent=51 // pred_fallthru
          _
      $region52: #{channel_mlp.1} parent=5 // pred_fallthru
        _
    $region6: #{channel_mlp.1} parent=1 // loop_footer
      %s18 = sadd.s32 1, %s14
    $region7: #{channel_mlp.1} parent=1 // loop_footer_branch
      %13 = sbr.rel target = $region3
    $region8: #{channel_mlp.1} parent=1 // loop_exit
      _
    %543 = vsyncpa [#allocation3], 1
    %s544 = scalar_lea.sflag [#allocation3], 1
    %545 = vsyncpa %s544, 1
    %546 = vsyncpa [#allocation4], 1
    %s547 = scalar_lea.sflag [#allocation4], 1
    %548 = vsyncpa %s547, 1
    %549 = vsyncpa [#allocation7], 1

</llo_original>
